<compile_context>
chip_gen: v7x
topology: tpu7x:2x2x1
jax: 0.10.0
libtpu: 0.0.40
codegen_flags: <defaults>
</compile_context>

<pallas_src>
import jax
import jax.numpy as jnp
import numpy as np
from jax.experimental import pallas as pl
from jax.experimental.pallas import tpu as pltpu

# ---------------- model hyper-parameters (small, consistent with the module) ----
INPUT_DIM = 16
HIDDEN = 32
OUTPUT_DIM = 8
NUM_MODES = 5
NUM_LAYERS = 2
MIN_STD = 1e-4          # unused by the eval-mode mean; kept for completeness
BATCH = 8

MEANS_FLAT = NUM_MODES * OUTPUT_DIM          # 40  (mode-major, matches torch .view)
HEAD_COLS = MEANS_FLAT + NUM_MODES           # 45  (fused mean-head | logits-head)

# ---------------- packed parameter layout (single bf16 weight buffer) -----------
_W1_R = 0                        # rows   0:16   cols 0:32   Linear(in, h)
_W2_R = _W1_R + INPUT_DIM        # rows  16:48   cols 0:32   Linear(h, h)
_W3H_R = _W2_R + HIDDEN          # rows  48:80   cols 0:45   fused W3 @ [mean | logits]
_S_R = _W3H_R + HIDDEN           # rows  80:120  cols 0:8    selection matrix S
_R_R = _S_R + MEANS_FLAT         # rows 120:125  cols 0:40   repeat matrix R (+3 zero rows)
W_ROWS = 128                     # padded to a multiple of 8 (and 16, for bf16 packing)
B_ROWS = 8                       # bias buffer rows (3 used, padded to a sublane tile)


def gmm_head_kernel(x_ref, w_ref, b_ref, out_ref):
    """One batch tile: bf16 MLP + fused head matmul + softmax mixture mean."""
    f32 = jnp.float32
    bf16 = jnp.bfloat16
    x = x_ref[...]                                        # (TB, INPUT_DIM), bf16

    # --- shared MLP (W3 already folded into the head): Linear+ReLU, Linear+ReLU ----
    h = jnp.dot(x, w_ref[_W1_R:_W1_R + INPUT_DIM, :HIDDEN],
                preferred_element_type=f32) + b_ref[0:1, :HIDDEN]
    h = jnp.maximum(h, 0.0).astype(bf16)
    h = jnp.dot(h, w_ref[_W2_R:_W2_R + HIDDEN, :HIDDEN],
                preferred_element_type=f32) + b_ref[1:2, :HIDDEN]
    h = jnp.maximum(h, 0.0).astype(bf16)

    # --- fused heads (includes the last shared Linear): one (32,45) matmul ---------
    # cols 0:40 = means (pre-tanh, mode-major), cols 40:45 = logits
    heads = jnp.dot(h, w_ref[_W3H_R:_W3H_R + HIDDEN, :HEAD_COLS],
                    preferred_element_type=f32) + b_ref[2:3, :HEAD_COLS]
    means_flat = jnp.tanh(heads[:, :MEANS_FLAT])          # (TB, 40), f32
    logits = heads[:, MEANS_FLAT:HEAD_COLS]               # (TB, 5),  f32

    # --- softmax over modes (Categorical(logits=...)) ------------------------------
    m = jnp.max(logits, axis=-1, keepdims=True)
    e = jnp.exp(logits - m)
    probs = e * pl.reciprocal(jnp.sum(e, axis=-1, keepdims=True), approx=True)

    # --- mixture mean via (tiny) MXU contractions; R/S are exact 0/1 in bf16 -------
    # probs_rep[:, k*D + d] = probs[:, k]        (lane-repeat through constant R)
    probs_rep = jnp.dot(probs,
                        w_ref[_R_R:_R_R + NUM_MODES, :MEANS_FLAT].astype(f32),
                        preferred_element_type=f32)       # (TB, 40)
    # out[:, d] = sum_k probs[:, k] * means[:, k, d]      (block-identity S)
    out = jnp.dot(means_flat * probs_rep,
                  w_ref[_S_R:_S_R + MEANS_FLAT, :OUTPUT_DIM].astype(f32),
                  preferred_element_type=f32)             # (TB, OUTPUT_DIM)
    out_ref[...] = out.astype(out_ref.dtype)


def _round_up(n, m):
    return ((n + m - 1) // m) * m


def pack_params(params):
    """Pack all weights (+ constant R/S matrices) into one bf16 buffer, biases into f32.

    The last shared Linear (W3, b3) is folded into the head matmul here:
        W3H = W3 @ [Wm | Wl]    b3H = b3 @ [Wm | Wl] + [bm | bl]
    which is exact (no nonlinearity between them) and done in f32 before the bf16 cast.
    """
    w3 = np.asarray(params["w3"], np.float32)
    b3 = np.asarray(params["b3"], np.float32).reshape(1, -1)
    wh = np.concatenate([np.asarray(params["wm"], np.float32),
                         np.asarray(params["wl"], np.float32)], axis=1)       # (32, 45)
    bh = np.concatenate([np.asarray(params["bm"], np.float32).reshape(1, -1),
                         np.asarray(params["bl"], np.float32).reshape(1, -1)],
                        axis=1)                                               # (1, 45)
    w3h = w3 @ wh                                                             # (32, 45)
    b3h = b3 @ wh + bh                                                        # (1, 45)

    w = np.zeros((W_ROWS, HEAD_COLS), np.float32)
    w[_W1_R:_W1_R + INPUT_DIM, :HIDDEN] = np.asarray(params["w1"], np.float32)
    w[_W2_R:_W2_R + HIDDEN, :HIDDEN] = np.asarray(params["w2"], np.float32)
    w[_W3H_R:_W3H_R + HIDDEN, :HEAD_COLS] = w3h
    j = np.arange(MEANS_FLAT)
    # S[k*D + d, d] = 1 : sums each mode's lane-group back down to OUTPUT_DIM lanes.
    w[_S_R + j, j % OUTPUT_DIM] = 1.0
    # R[k, k*D + d] = 1 : lane-repeats each mode probability OUTPUT_DIM times.
    w[_R_R + j // OUTPUT_DIM, j] = 1.0

    b = np.zeros((B_ROWS, HEAD_COLS), np.float32)
    b[0, :HIDDEN] = np.asarray(params["b1"]).reshape(-1)
    b[1, :HIDDEN] = np.asarray(params["b2"]).reshape(-1)
    b[2, :HEAD_COLS] = b3h.reshape(-1)
    # Weights (incl. exact 0/1 R, S) in bf16 for native MXU passes; biases stay f32.
    return jnp.asarray(w, jnp.bfloat16), jnp.asarray(b, jnp.float32)


def gmm_head_forward(x, w_packed, b_packed, *, tile_b=1024):
    """Eval-mode GMMHead.forward: returns the GMM mean, shape (B, output_dim), f32."""
    batch = x.shape[0]
    # Tile is a multiple of 16 (bf16 sublane packing) and capped at 2048 so the
    # lane-padded intermediates + double-buffered I/O stay comfortable inside v7x's
    # 64 MiB physical VMEM; vmem_limit_bytes below covers v5e's 16 MiB scoped default.
    tile_b = int(min(max(_round_up(tile_b, 16), 16), 2048))
    tb = min(tile_b, _round_up(batch, 16))
    bp = _round_up(batch, tb)

    x = x.astype(jnp.bfloat16)          # halves the only nontrivial HBM traffic
    if bp != batch:
        x = jnp.pad(x, ((0, bp - batch), (0, 0)))
    # NOTE: on v7x the two TensorCores only help when the grid has >= 2 balanced steps;
    # a batch that fits one tile keeps grid=(1,) (splitting a tiny tile is overhead).
    grid = (bp // tb,)

    cost = pl.CostEstimate(
        flops=2 * bp * (INPUT_DIM * HIDDEN + HIDDEN * HIDDEN + HIDDEN * HEAD_COLS
                        + NUM_MODES * MEANS_FLAT + MEANS_FLAT * OUTPUT_DIM),
        transcendentals=bp * (MEANS_FLAT + NUM_MODES + 1),
        bytes_accessed=(2 * W_ROWS * HEAD_COLS + 4 * B_ROWS * HEAD_COLS
                        + 2 * bp * INPUT_DIM + 4 * bp * OUTPUT_DIM),
    )

    def _call(const_pipeline_mode):
        const_kw = ({} if const_pipeline_mode is None
                    else dict(pipeline_mode=const_pipeline_mode))
        return pl.pallas_call(
            gmm_head_kernel,
            out_shape=jax.ShapeDtypeStruct((bp, OUTPUT_DIM), jnp.float32),
            grid=grid,
            in_specs=[
                pl.BlockSpec((tb, INPUT_DIM), lambda i: (i, 0)),               # batch tile
                pl.BlockSpec((W_ROWS, HEAD_COLS), lambda i: (0, 0), **const_kw),  # weights
                pl.BlockSpec((B_ROWS, HEAD_COLS), lambda i: (0, 0), **const_kw),  # biases
            ],
            out_specs=pl.BlockSpec((tb, OUTPUT_DIM), lambda i: (i, 0)),
            compiler_params=pltpu.CompilerParams(
                dimension_semantics=("parallel",),
                vmem_limit_bytes=32 * 1024 * 1024),
            cost_estimate=cost,
        )(x, w_packed, b_packed)

    try:
        # Constant index_map -> DMA'd once; Buffered(1) drops the useless second buffer.
        out = jax.block_until_ready(_call(pl.Buffered(1)))
    except Exception:
        # Fallback if this jax build does not accept pipeline_mode on the TPU main
        # pipeline; the default double buffer only wastes ~13 KB of VMEM here.
        out = jax.block_until_ready(_call(None))
    return out[:batch] if bp != batch else out


def init_params(key):
    """Deterministic synthetic init (PyTorch-Linear-like uniform scaling)."""
    def linear(k, fan_in, fan_out):
        k1, k2 = jax.random.split(k)
        bound = 1.0 / np.sqrt(fan_in)
        w = jax.random.uniform(k1, (fan_in, fan_out), jnp.float32, -bound, bound)
        b = jax.random.uniform(k2, (1, fan_out), jnp.float32, -bound, bound)
        return w, b

    keys = jax.random.split(key, 6)
    w1, b1 = linear(keys[0], INPUT_DIM, HIDDEN)
    w2, b2 = linear(keys[1], HIDDEN, HIDDEN)
    w3, b3 = linear(keys[2], HIDDEN, HIDDEN)
    wm, bm = linear(keys[3], HIDDEN, OUTPUT_DIM * NUM_MODES)
    wl, bl = linear(keys[4], HIDDEN, NUM_MODES)
    # logstd_layer exists in the module but is unused by the eval-mode forward.
    wls, bls = linear(keys[5], HIDDEN, OUTPUT_DIM * NUM_MODES)
    return dict(w1=w1, b1=b1, w2=w2, b2=b2, w3=w3, b3=b3,
                wm=wm, bm=bm, wl=wl, bl=bl, wls=wls, bls=bls)


def reference_forward(x, p):
    """Pure-JAX f32 reference of the eval-mode GMMHead forward (the GMM mean)."""
    h = jnp.maximum(x @ p["w1"] + p["b1"], 0.0)
    h = jnp.maximum(h @ p["w2"] + p["b2"], 0.0)
    share = h @ p["w3"] + p["b3"]
    means = jnp.tanh(share @ p["wm"] + p["bm"]).reshape(-1, NUM_MODES, OUTPUT_DIM)
    logits = share @ p["wl"] + p["bl"]
    probs = jax.nn.softmax(logits, axis=-1)
    return jnp.sum(probs[:, :, None] * means, axis=1)


if __name__ == "__main__":
    key = jax.random.PRNGKey(0)
    kx1, kx2, kp = jax.random.split(key, 3)
    params = init_params(kp)
    w_packed, b_packed = pack_params(params)

    # Primary small-shape check (batch 8 -> padded 16, single grid step).
    # Tolerance is 2e-2: matmul operands are bf16 (f32 accumulation) and the softmax
    # uses the approximate EUP reciprocal; reference is full f32.
    x = jax.random.normal(kx1, (BATCH, INPUT_DIM), dtype=jnp.float32)
    out = jax.block_until_ready(gmm_head_forward(x, w_packed, b_packed))
    ref = reference_forward(x, params)
    np.testing.assert_allclose(np.asarray(out), np.asarray(ref), rtol=2e-2, atol=2e-2)

    # Exercise the multi-step batch grid + padding path (tile_b=16, B=40 -> 3 steps).
    x2 = jax.random.normal(kx2, (40, INPUT_DIM), dtype=jnp.float32)
    out2 = jax.block_until_ready(gmm_head_forward(x2, w_packed, b_packed, tile_b=16))
    ref2 = reference_forward(x2, params)
    np.testing.assert_allclose(np.asarray(out2), np.asarray(ref2), rtol=2e-2, atol=2e-2)

    print("KERNEL_OK")
</pallas_src>

<mosaic_0001>
module attributes {stable_mosaic.version = 11 : i64} {
  func.func @gmm_head_kernel(%arg0: i32, %arg1: memref<16x16xbf16, #tpu.memory_space<vmem>>, %arg2: memref<128x45xbf16, #tpu.memory_space<vmem>>, %arg3: memref<8x45xf32, #tpu.memory_space<vmem>>, %arg4: memref<16x8xf32, #tpu.memory_space<vmem>>) attributes {dimension_semantics = [#tpu.dimension_semantics<parallel>], iteration_bounds = array<i64: 1>, scalar_prefetch = 0 : i64, scratch_operands = 0 : i64, tpu.core_type = #tpu.core_type<tc>, window_params = [{transform_indices = @transform_0, window_bounds = array<i64: 16, 16>}, {pipeline_mode = #tpu.pipeline_mode<synchronous>, transform_indices = @transform_1, window_bounds = array<i64: 128, 45>}, {pipeline_mode = #tpu.pipeline_mode<synchronous>, transform_indices = @transform_2, window_bounds = array<i64: 8, 45>}, {transform_indices = @transform_3, window_bounds = array<i64: 16, 8>}]} {
    %c0 = arith.constant 0 : index
    %c0_0 = arith.constant 0 : index
    %0 = vector.load %arg1[%c0, %c0_0] : memref<16x16xbf16, #tpu.memory_space<vmem>>, vector<16x16xbf16>
    %c0_1 = arith.constant 0 : index
    %c0_2 = arith.constant 0 : index
    %1 = vector.load %arg2[%c0_1, %c0_2] : memref<128x45xbf16, #tpu.memory_space<vmem>>, vector<16x32xbf16>
    %cst = arith.constant dense<0.000000e+00> : vector<16x32xf32>
    %2 = tpu.matmul %0, %1, %cst {dimension_numbers = #tpu.dot_dimension_numbers<[1], [0], [0], [1], [0, 0, 1, 1], [], []>} : vector<16x16xbf16>, vector<16x32xbf16>, vector<16x32xf32> -> vector<16x32xf32>
    %c0_3 = arith.constant 0 : index
    %c0_4 = arith.constant 0 : index
    %3 = vector.load %arg3[%c0_3, %c0_4] : memref<8x45xf32, #tpu.memory_space<vmem>>, vector<1x32xf32>
    %4 = vector.broadcast %3 : vector<1x32xf32> to vector<16x32xf32>
    %5 = arith.addf %2, %4 : vector<16x32xf32>
    %cst_5 = arith.constant 0.000000e+00 : f32
    %6 = vector.broadcast %cst_5 : f32 to vector<16x32xf32>
    %7 = arith.maximumf %5, %6 : vector<16x32xf32>
    %8 = arith.truncf %7 : vector<16x32xf32> to vector<16x32xbf16>
    %c16 = arith.constant 16 : index
    %c0_6 = arith.constant 0 : index
    %9 = vector.load %arg2[%c16, %c0_6] : memref<128x45xbf16, #tpu.memory_space<vmem>>, vector<32x32xbf16>
    %cst_7 = arith.constant dense<0.000000e+00> : vector<16x32xf32>
    %10 = tpu.matmul %8, %9, %cst_7 {dimension_numbers = #tpu.dot_dimension_numbers<[1], [0], [0], [1], [0, 0, 1, 1], [], []>} : vector<16x32xbf16>, vector<32x32xbf16>, vector<16x32xf32> -> vector<16x32xf32>
    %c1 = arith.constant 1 : index
    %c0_8 = arith.constant 0 : index
    %11 = vector.load %arg3[%c1, %c0_8] : memref<8x45xf32, #tpu.memory_space<vmem>>, vector<1x32xf32>
    %12 = vector.broadcast %11 : vector<1x32xf32> to vector<16x32xf32>
    %13 = arith.addf %10, %12 : vector<16x32xf32>
    %cst_9 = arith.constant 0.000000e+00 : f32
    %14 = vector.broadcast %cst_9 : f32 to vector<16x32xf32>
    %15 = arith.maximumf %13, %14 : vector<16x32xf32>
    %16 = arith.truncf %15 : vector<16x32xf32> to vector<16x32xbf16>
    %c48 = arith.constant 48 : index
    %c0_10 = arith.constant 0 : index
    %17 = vector.load %arg2[%c48, %c0_10] : memref<128x45xbf16, #tpu.memory_space<vmem>>, vector<32x45xbf16>
    %cst_11 = arith.constant dense<0.000000e+00> : vector<16x45xf32>
    %18 = tpu.matmul %16, %17, %cst_11 {dimension_numbers = #tpu.dot_dimension_numbers<[1], [0], [0], [1], [0, 0, 1, 1], [], []>} : vector<16x32xbf16>, vector<32x45xbf16>, vector<16x45xf32> -> vector<16x45xf32>
    %c2 = arith.constant 2 : index
    %c0_12 = arith.constant 0 : index
    %19 = vector.load %arg3[%c2, %c0_12] : memref<8x45xf32, #tpu.memory_space<vmem>>, vector<1x45xf32>
    %20 = vector.broadcast %19 : vector<1x45xf32> to vector<16x45xf32>
    %21 = arith.addf %18, %20 : vector<16x45xf32>
    %22 = vector.extract_strided_slice %21 {offsets = [0, 0], sizes = [16, 40], strides = [1, 1]} : vector<16x45xf32> to vector<16x40xf32>
    %23 = math.tanh %22 : vector<16x40xf32>
    %24 = vector.extract_strided_slice %21 {offsets = [0, 40], sizes = [16, 5], strides = [1, 1]} : vector<16x45xf32> to vector<16x5xf32>
    %cst_13 = arith.constant dense<0xFF800000> : vector<16xf32>
    %25 = vector.multi_reduction <maximumf>, %24, %cst_13 [1] : vector<16x5xf32> to vector<16xf32>
    %26 = vector.shape_cast %25 : vector<16xf32> to vector<16x1xf32>
    %27 = vector.broadcast %26 : vector<16x1xf32> to vector<16x5xf32>
    %28 = arith.subf %24, %27 : vector<16x5xf32>
    %29 = math.exp %28 : vector<16x5xf32>
    %cst_14 = arith.constant dense<0.000000e+00> : vector<16xf32>
    %30 = vector.multi_reduction <add>, %29, %cst_14 [1] : vector<16x5xf32> to vector<16xf32>
    %31 = vector.shape_cast %30 : vector<16xf32> to vector<16x1xf32>
    %32 = tpu.reciprocal %31 {approx = true} : vector<16x1xf32> -> vector<16x1xf32>
    %33 = vector.broadcast %32 : vector<16x1xf32> to vector<16x5xf32>
    %34 = arith.mulf %29, %33 : vector<16x5xf32>
    %c120 = arith.constant 120 : index
    %c0_15 = arith.constant 0 : index
    %35 = vector.load %arg2[%c120, %c0_15] : memref<128x45xbf16, #tpu.memory_space<vmem>>, vector<5x40xbf16>
    %36 = arith.extf %35 : vector<5x40xbf16> to vector<5x40xf32>
    %cst_16 = arith.constant dense<0.000000e+00> : vector<16x40xf32>
    %37 = tpu.matmul %34, %36, %cst_16 {dimension_numbers = #tpu.dot_dimension_numbers<[1], [0], [0], [1], [0, 0, 1, 1], [], []>} : vector<16x5xf32>, vector<5x40xf32>, vector<16x40xf32> -> vector<16x40xf32>
    %38 = arith.mulf %23, %37 : vector<16x40xf32>
    %c80 = arith.constant 80 : index
    %c0_17 = arith.constant 0 : index
    %39 = vector.load %arg2[%c80, %c0_17] : memref<128x45xbf16, #tpu.memory_space<vmem>>, vector<40x8xbf16>
    %40 = arith.extf %39 : vector<40x8xbf16> to vector<40x8xf32>
    %cst_18 = arith.constant dense<0.000000e+00> : vector<16x8xf32>
    %41 = tpu.matmul %38, %40, %cst_18 {dimension_numbers = #tpu.dot_dimension_numbers<[1], [0], [0], [1], [0, 0, 1, 1], [], []>} : vector<16x40xf32>, vector<40x8xf32>, vector<16x8xf32> -> vector<16x8xf32>
    %c0_19 = arith.constant 0 : index
    %c0_20 = arith.constant 0 : index
    %42 = vector.load %arg4[%c0_19, %c0_20] : memref<16x8xf32, #tpu.memory_space<vmem>>, vector<16x8xf32>
    tpu.vector_store %arg4[%c0_19, %c0_20], %41 {strides = array<i32>} : memref<16x8xf32, #tpu.memory_space<vmem>>, vector<16x8xf32>,
    return
  }
  func.func @transform_0(%arg0: i32) -> (i32, i32) {
    %c0_i32 = arith.constant 0 : i32
    %c0_i32_0 = arith.constant 0 : i32
    return %arg0, %c0_i32 : i32, i32
  }
  func.func @transform_1(%arg0: i32) -> (i32, i32) {
    %c0_i32 = arith.constant 0 : i32
    %c0_i32_0 = arith.constant 0 : i32
    %c0_i32_1 = arith.constant 0 : i32
    return %c0_i32, %c0_i32_0 : i32, i32
  }
  func.func @transform_2(%arg0: i32) -> (i32, i32) {
    %c0_i32 = arith.constant 0 : i32
    %c0_i32_0 = arith.constant 0 : i32
    %c0_i32_1 = arith.constant 0 : i32
    return %c0_i32, %c0_i32_0 : i32, i32
  }
  func.func @transform_3(%arg0: i32) -> (i32, i32) {
    %c0_i32 = arith.constant 0 : i32
    %c0_i32_0 = arith.constant 0 : i32
    return %arg0, %c0_i32 : i32, i32
  }
}

module attributes {stable_mosaic.version = 11 : i64} {
  func.func @gmm_head_kernel(%arg0: i32, %arg1: memref<16x16xbf16, #tpu.memory_space<vmem>>, %arg2: memref<128x45xbf16, #tpu.memory_space<vmem>>, %arg3: memref<8x45xf32, #tpu.memory_space<vmem>>, %arg4: memref<16x8xf32, #tpu.memory_space<vmem>>) attributes {dimension_semantics = [#tpu.dimension_semantics<parallel>], iteration_bounds = array<i64: 1>, scalar_prefetch = 0 : i64, scratch_operands = 0 : i64, tpu.core_type = #tpu.core_type<tc>, window_params = [{transform_indices = @transform_0, window_bounds = array<i64: 16, 16>}, {pipeline_mode = #tpu.pipeline_mode<synchronous>, transform_indices = @transform_1, window_bounds = array<i64: 128, 45>}, {pipeline_mode = #tpu.pipeline_mode<synchronous>, transform_indices = @transform_2, window_bounds = array<i64: 8, 45>}, {transform_indices = @transform_3, window_bounds = array<i64: 16, 8>}]} {
    %c0 = arith.constant 0 : index
    %c0_0 = arith.constant 0 : index
    %0 = vector.load %arg1[%c0, %c0_0] : memref<16x16xbf16, #tpu.memory_space<vmem>>, vector<16x16xbf16>
    %c0_1 = arith.constant 0 : index
    %c0_2 = arith.constant 0 : index
    %1 = vector.load %arg2[%c0_1, %c0_2] : memref<128x45xbf16, #tpu.memory_space<vmem>>, vector<16x32xbf16>
    %cst = arith.constant dense<0.000000e+00> : vector<16x32xf32>
    %2 = tpu.matmul %0, %1, %cst {dimension_numbers = #tpu.dot_dimension_numbers<[1], [0], [0], [1], [0, 0, 1, 1], [], []>} : vector<16x16xbf16>, vector<16x32xbf16>, vector<16x32xf32> -> vector<16x32xf32>
    %c0_3 = arith.constant 0 : index
    %c0_4 = arith.constant 0 : index
    %3 = vector.load %arg3[%c0_3, %c0_4] : memref<8x45xf32, #tpu.memory_space<vmem>>, vector<1x32xf32>
    %4 = vector.broadcast %3 : vector<1x32xf32> to vector<16x32xf32>
    %5 = arith.addf %2, %4 : vector<16x32xf32>
    %cst_5 = arith.constant 0.000000e+00 : f32
    %6 = vector.broadcast %cst_5 : f32 to vector<16x32xf32>
    %7 = arith.maximumf %5, %6 : vector<16x32xf32>
    %8 = arith.truncf %7 : vector<16x32xf32> to vector<16x32xbf16>
    %c16 = arith.constant 16 : index
    %c0_6 = arith.constant 0 : index
    %9 = vector.load %arg2[%c16, %c0_6] : memref<128x45xbf16, #tpu.memory_space<vmem>>, vector<32x32xbf16>
    %cst_7 = arith.constant dense<0.000000e+00> : vector<16x32xf32>
    %10 = tpu.matmul %8, %9, %cst_7 {dimension_numbers = #tpu.dot_dimension_numbers<[1], [0], [0], [1], [0, 0, 1, 1], [], []>} : vector<16x32xbf16>, vector<32x32xbf16>, vector<16x32xf32> -> vector<16x32xf32>
    %c1 = arith.constant 1 : index
    %c0_8 = arith.constant 0 : index
    %11 = vector.load %arg3[%c1, %c0_8] : memref<8x45xf32, #tpu.memory_space<vmem>>, vector<1x32xf32>
    %12 = vector.broadcast %11 : vector<1x32xf32> to vector<16x32xf32>
    %13 = arith.addf %10, %12 : vector<16x32xf32>
    %cst_9 = arith.constant 0.000000e+00 : f32
    %14 = vector.broadcast %cst_9 : f32 to vector<16x32xf32>
    %15 = arith.maximumf %13, %14 : vector<16x32xf32>
    %16 = arith.truncf %15 : vector<16x32xf32> to vector<16x32xbf16>
    %c48 = arith.constant 48 : index
    %c0_10 = arith.constant 0 : index
    %17 = vector.load %arg2[%c48, %c0_10] : memref<128x45xbf16, #tpu.memory_space<vmem>>, vector<32x45xbf16>
    %cst_11 = arith.constant dense<0.000000e+00> : vector<16x45xf32>
    %18 = tpu.matmul %16, %17, %cst_11 {dimension_numbers = #tpu.dot_dimension_numbers<[1], [0], [0], [1], [0, 0, 1, 1], [], []>} : vector<16x32xbf16>, vector<32x45xbf16>, vector<16x45xf32> -> vector<16x45xf32>
    %c2 = arith.constant 2 : index
    %c0_12 = arith.constant 0 : index
    %19 = vector.load %arg3[%c2, %c0_12] : memref<8x45xf32, #tpu.memory_space<vmem>>, vector<1x45xf32>
    %20 = vector.broadcast %19 : vector<1x45xf32> to vector<16x45xf32>
    %21 = arith.addf %18, %20 : vector<16x45xf32>
    %22 = vector.extract_strided_slice %21 {offsets = [0, 0], sizes = [16, 40], strides = [1, 1]} : vector<16x45xf32> to vector<16x40xf32>
    %23 = math.tanh %22 : vector<16x40xf32>
    %24 = vector.extract_strided_slice %21 {offsets = [0, 40], sizes = [16, 5], strides = [1, 1]} : vector<16x45xf32> to vector<16x5xf32>
    %cst_13 = arith.constant dense<0xFF800000> : vector<16xf32>
    %25 = vector.multi_reduction <maximumf>, %24, %cst_13 [1] : vector<16x5xf32> to vector<16xf32>
    %26 = vector.shape_cast %25 : vector<16xf32> to vector<16x1xf32>
    %27 = vector.broadcast %26 : vector<16x1xf32> to vector<16x5xf32>
    %28 = arith.subf %24, %27 : vector<16x5xf32>
    %29 = math.exp %28 : vector<16x5xf32>
    %cst_14 = arith.constant dense<0.000000e+00> : vector<16xf32>
    %30 = vector.multi_reduction <add>, %29, %cst_14 [1] : vector<16x5xf32> to vector<16xf32>
    %31 = vector.shape_cast %30 : vector<16xf32> to vector<16x1xf32>
    %32 = tpu.reciprocal %31 {approx = true} : vector<16x1xf32> -> vector<16x1xf32>
    %33 = vector.broadcast %32 : vector<16x1xf32> to vector<16x5xf32>
    %34 = arith.mulf %29, %33 : vector<16x5xf32>
    %c120 = arith.constant 120 : index
    %c0_15 = arith.constant 0 : index
    %35 = vector.load %arg2[%c120, %c0_15] : memref<128x45xbf16, #tpu.memory_space<vmem>>, vector<5x40xbf16>
    %36 = arith.extf %35 : vector<5x40xbf16> to vector<5x40xf32>
    %cst_16 = arith.constant dense<0.000000e+00> : vector<16x40xf32>
    %37 = tpu.matmul %34, %36, %cst_16 {dimension_numbers = #tpu.dot_dimension_numbers<[1], [0], [0], [1], [0, 0, 1, 1], [], []>} : vector<16x5xf32>, vector<5x40xf32>, vector<16x40xf32> -> vector<16x40xf32>
    %38 = arith.mulf %23, %37 : vector<16x40xf32>
    %c80 = arith.constant 80 : index
    %c0_17 = arith.constant 0 : index
    %39 = vector.load %arg2[%c80, %c0_17] : memref<128x45xbf16, #tpu.memory_space<vmem>>, vector<40x8xbf16>
    %40 = arith.extf %39 : vector<40x8xbf16> to vector<40x8xf32>
    %cst_18 = arith.constant dense<0.000000e+00> : vector<16x8xf32>
    %41 = tpu.matmul %38, %40, %cst_18 {dimension_numbers = #tpu.dot_dimension_numbers<[1], [0], [0], [1], [0, 0, 1, 1], [], []>} : vector<16x40xf32>, vector<40x8xf32>, vector<16x8xf32> -> vector<16x8xf32>
    %c0_19 = arith.constant 0 : index
    %c0_20 = arith.constant 0 : index
    %42 = vector.load %arg4[%c0_19, %c0_20] : memref<16x8xf32, #tpu.memory_space<vmem>>, vector<16x8xf32>
    tpu.vector_store %arg4[%c0_19, %c0_20], %41 {strides = array<i32>} : memref<16x8xf32, #tpu.memory_space<vmem>>, vector<16x8xf32>,
    return
  }
  func.func @transform_0(%arg0: i32) -> (i32, i32) {
    %c0_i32 = arith.constant 0 : i32
    %c0_i32_0 = arith.constant 0 : i32
    return %arg0, %c0_i32 : i32, i32
  }
  func.func @transform_1(%arg0: i32) -> (i32, i32) {
    %c0_i32 = arith.constant 0 : i32
    %c0_i32_0 = arith.constant 0 : i32
    %c0_i32_1 = arith.constant 0 : i32
    return %c0_i32, %c0_i32_0 : i32, i32
  }
  func.func @transform_2(%arg0: i32) -> (i32, i32) {
    %c0_i32 = arith.constant 0 : i32
    %c0_i32_0 = arith.constant 0 : i32
    %c0_i32_1 = arith.constant 0 : i32
    return %c0_i32, %c0_i32_0 : i32, i32
  }
  func.func @transform_3(%arg0: i32) -> (i32, i32) {
    %c0_i32 = arith.constant 0 : i32
    %c0_i32_0 = arith.constant 0 : i32
    return %arg0, %c0_i32 : i32, i32
  }
}

</mosaic_0001>

<llo_original>
// kernel: tpu_custom_call.1
$region0: #{tpu_custom_call.1}
  #allocation0 [shape = 'u32[]', space=smem, size = 0x4, offset = 0x4, fixed_abs, tag = 'smem constant byte address 0x4 - core index']
  #allocation1 [shape = 'u32[144,128]{1,0:T(1,128)}', space=vmem, size = 0x12000, scoped, tag = 'internal scratch']
  %s0 = inlined_call_operand.vmem [shape: bf16[16,16], index: 0, kind: input, shape index: {}]
  %s1 = inlined_call_operand.vmem [shape: bf16[128,45], index: 1, kind: input, shape index: {}]
  %s2 = inlined_call_operand.vmem [shape: f32[8,45], index: 2, kind: input, shape index: {}]
  %s3 = inlined_call_operand.vmem [shape: f32[16,8], index: 3, kind: output, shape index: {}]
  %s4 = sld [smem:[#allocation0]]
  $region22: #{tpu_custom_call.1} parent=0
    _
  %s6 = ssub.s32 1, %s4
  %s7 = scalar_select 0, %s6, %s4
  // Predicated region
  $region2: #{tpu_custom_call.1} parent=0 // pred_check
    _
  $region3: #{tpu_custom_call.1} parent=0 // pred_check_branch
    %9 = sbr.rel (0) target = $region5
  $region4: #{tpu_custom_call.1} parent=0 // pred_region
    _
  $region5: #{tpu_custom_call.1} parent=0 // pred_fallthru
    _
  // Predicated region
  $region6: #{tpu_custom_call.1} parent=0 // pred_check
    _
  $region7: #{tpu_custom_call.1} parent=0 // pred_check_branch
    %11 = sbr.rel (0) target = $region9
  $region8: #{tpu_custom_call.1} parent=0 // pred_region
    _
  $region9: #{tpu_custom_call.1} parent=0 // pred_fallthru
    _
  // Predicated region
  $region10: #{tpu_custom_call.1} parent=0 // pred_check
    _
  $region11: #{tpu_custom_call.1} parent=0 // pred_check_branch
    %13 = sbr.rel (0) target = $region13
  $region12: #{tpu_custom_call.1} parent=0 // pred_region
    _
  $region13: #{tpu_custom_call.1} parent=0 // pred_fallthru
    _
  %v15 = vld [vmem:[%s0] sm:$0xf]
  %v16 = vld [vmem:[%s0 + $0x4] sm:$0xf]
  %v17 = vld [vmem:[%s1] sm:$0xf]
  %v18 = vld [vmem:[%s1 + $0x4] sm:$0xf]
  %v19 = vld [vmem:[%s2] sm:$0x1]
  %v20 = vlaneseq
  %v21 = vshrl.u32 %v20, 7
  %v22 = vsub.s32 0, %v21
  %v23 = vrot.slane %v19, %v22
  %v26 = vunpack.c.l.b16 %v15
  %v27 = vunpack.c.l.b16 %v16
  %v28 = vpack.c.b16 %v27, %v26
  %v31 = vunpack.c.l.b16 %v17
  %v32 = vunpack.c.l.b16 %v18
  %v33 = vpack.c.b16 %v32, %v31
  %vm35 = vcmask 130048
  %v37 = vsel %vm35, %v28, 0
  %39 = vmatprep.subr.bf16.mxu0 0
  %40 = vmatpush1.bf16.msra.mxu0 %v33
  %41 = vmatprep.subr.bf16.mxu0 0
  %42 = vmatpush1.bf16.msra.mxu0 0
  %43 = vmatprep.subr.bf16.mxu0 0
  %44 = vmatpush1.bf16.msra.mxu0 0
  %45 = vmatprep.subr.bf16.mxu0 0
  %46 = vmatpush1.bf16.msra.mxu0 0
  %47 = vmatprep.subr.bf16.mxu0 0
  %48 = vmatpush1.bf16.msra.mxu0 0
  %49 = vmatprep.subr.bf16.mxu0 0
  %50 = vmatpush1.bf16.msra.mxu0 0
  %51 = vmatprep.subr.bf16.mxu0 0
  %52 = vmatpush1.bf16.msra.mxu0 0
  %53 = vmatprep.subr.bf16.mxu0 0
  %54 = vmatpush1.bf16.msra.mxu0 0
  %55 = vmatprep.subr.bf16.mxu0 0
  %56 = vmatpush1.bf16.msra.mxu0 0
  %57 = vmatprep.subr.bf16.mxu0 0
  %58 = vmatpush1.bf16.msra.mxu0 0
  %59 = vmatprep.subr.bf16.mxu0 0
  %60 = vmatpush1.bf16.msra.mxu0 0
  %61 = vmatprep.subr.bf16.mxu0 0
  %62 = vmatpush1.bf16.msra.mxu0 0
  %63 = vmatprep.subr.bf16.mxu0 0
  %64 = vmatpush1.bf16.msra.mxu0 0
  %65 = vmatprep.subr.bf16.mxu0 0
  %66 = vmatpush1.bf16.msra.mxu0 0
  %67 = vmatprep.subr.bf16.mxu0 0
  %68 = vmatpush1.bf16.msra.mxu0 0
  %69 = vmatprep.subr.bf16.mxu0 0
  %70 = vmatpush1.bf16.msra.mxu0 0
  %71 = vmatprep.mubr.bf16.mxu0 0
  %72 = vmatmul.mubr.bf16.gmra.mrb[0].mxu0 %v37
  %v73 = vpop.f32.mrb[0].mxu0
  %v74 = vadd.f32 %v23, %v73
  %v75 = vpop.f32.mrb[0].mxu0
  %v76 = vpop.f32.mrb[0].mxu0
  %v77 = vadd.f32 %v23, %v76
  %v78 = vpop.f32.mrb[0].mxu0
  %79 = vdwg.mxu0
  %v80 = vmax.f32 %v74, 0.0
  %v81 = vmax.f32 %v77, 0.0
  %v82 = vpack.c.bf16 %v81, %v80
  %v83 = vld [vmem:[%s1 + $0x8] sm:$0xf]
  %v84 = vld [vmem:[%s1 + $0xc] sm:$0xf]
  %v85 = vld [vmem:[%s1 + $0x10] sm:$0xf]
  %v86 = vld [vmem:[%s1 + $0x14] sm:$0xf]
  %v87 = vld [vmem:[%s2 + $0x1] sm:$0x1]
  %v88 = vlaneseq
  %v89 = vshrl.u32 %v88, 7
  %v90 = vsub.s32 0, %v89
  %v91 = vrot.slane %v87, %v90
  %v96 = vunpack.c.l.b16 %v83
  %v97 = vunpack.c.l.b16 %v84
  %v98 = vunpack.c.l.b16 %v85
  %v99 = vunpack.c.l.b16 %v86
  %v100 = vpack.c.b16 %v97, %v96
  %v101 = vpack.c.b16 %v99, %v98
  %vm104 = vcmask 261120
  %v106 = vsel %vm104, %v82, 0
  %108 = vmatprep.subr.bf16.mxu0 0
  %109 = vmatpush1.bf16.msra.mxu0 %v100
  %110 = vmatprep.subr.bf16.mxu0 0
  %111 = vmatpush1.bf16.msra.mxu0 %v101
  %112 = vmatprep.subr.bf16.mxu0 0
  %113 = vmatpush1.bf16.msra.mxu0 0
  %114 = vmatprep.subr.bf16.mxu0 0
  %115 = vmatpush1.bf16.msra.mxu0 0
  %116 = vmatprep.subr.bf16.mxu0 0
  %117 = vmatpush1.bf16.msra.mxu0 0
  %118 = vmatprep.subr.bf16.mxu0 0
  %119 = vmatpush1.bf16.msra.mxu0 0
  %120 = vmatprep.subr.bf16.mxu0 0
  %121 = vmatpush1.bf16.msra.mxu0 0
  %122 = vmatprep.subr.bf16.mxu0 0
  %123 = vmatpush1.bf16.msra.mxu0 0
  %124 = vmatprep.subr.bf16.mxu0 0
  %125 = vmatpush1.bf16.msra.mxu0 0
  %126 = vmatprep.subr.bf16.mxu0 0
  %127 = vmatpush1.bf16.msra.mxu0 0
  %128 = vmatprep.subr.bf16.mxu0 0
  %129 = vmatpush1.bf16.msra.mxu0 0
  %130 = vmatprep.subr.bf16.mxu0 0
  %131 = vmatpush1.bf16.msra.mxu0 0
  %132 = vmatprep.subr.bf16.mxu0 0
  %133 = vmatpush1.bf16.msra.mxu0 0
  %134 = vmatprep.subr.bf16.mxu0 0
  %135 = vmatpush1.bf16.msra.mxu0 0
  %136 = vmatprep.subr.bf16.mxu0 0
  %137 = vmatpush1.bf16.msra.mxu0 0
  %138 = vmatprep.subr.bf16.mxu0 0
  %139 = vmatpush1.bf16.msra.mxu0 0
  %140 = vmatprep.mubr.bf16.mxu0 0
  %141 = vmatmul.mubr.bf16.gmra.mrb[0].mxu0 %v106
  %v142 = vpop.f32.mrb[0].mxu0
  %v143 = vadd.f32 %v91, %v142
  %v144 = vpop.f32.mrb[0].mxu0
  %v145 = vpop.f32.mrb[0].mxu0
  %v146 = vadd.f32 %v91, %v145
  %v147 = vpop.f32.mrb[0].mxu0
  %148 = vdwg.mxu0
  %v149 = vmax.f32 %v143, 0.0
  %v150 = vmax.f32 %v146, 0.0
  %v151 = vpack.c.bf16 %v150, %v149
  %v152 = vld [vmem:[%s1 + $0x18] sm:$0xf]
  %v153 = vld [vmem:[%s1 + $0x1c] sm:$0xf]
  %v154 = vld [vmem:[%s1 + $0x20] sm:$0xf]
  %v155 = vld [vmem:[%s1 + $0x24] sm:$0xf]
  %v156 = vld [vmem:[%s2 + $0x2] sm:$0x1]
  %v157 = vlaneseq
  %v158 = vshrl.u32 %v157, 7
  %v159 = vsub.s32 0, %v158
  %v160 = vrot.slane %v156, %v159
  %v165 = vunpack.c.l.b16 %v152
  %v166 = vunpack.c.l.b16 %v153
  %v167 = vunpack.c.l.b16 %v154
  %v168 = vunpack.c.l.b16 %v155
  %v169 = vpack.c.b16 %v166, %v165
  %v170 = vpack.c.b16 %v168, %v167
  %v174 = vsel %vm104, %v151, 0
  %176 = vmatprep.subr.bf16.mxu0 0
  %177 = vmatpush1.bf16.msra.mxu0 %v169
  %178 = vmatprep.subr.bf16.mxu0 0
  %179 = vmatpush1.bf16.msra.mxu0 %v170
  %180 = vmatprep.subr.bf16.mxu0 0
  %181 = vmatpush1.bf16.msra.mxu0 0
  %182 = vmatprep.subr.bf16.mxu0 0
  %183 = vmatpush1.bf16.msra.mxu0 0
  %184 = vmatprep.subr.bf16.mxu0 0
  %185 = vmatpush1.bf16.msra.mxu0 0
  %186 = vmatprep.subr.bf16.mxu0 0
  %187 = vmatpush1.bf16.msra.mxu0 0
  %188 = vmatprep.subr.bf16.mxu0 0
  %189 = vmatpush1.bf16.msra.mxu0 0
  %190 = vmatprep.subr.bf16.mxu0 0
  %191 = vmatpush1.bf16.msra.mxu0 0
  %192 = vmatprep.subr.bf16.mxu0 0
  %193 = vmatpush1.bf16.msra.mxu0 0
  %194 = vmatprep.subr.bf16.mxu0 0
  %195 = vmatpush1.bf16.msra.mxu0 0
  %196 = vmatprep.subr.bf16.mxu0 0
  %197 = vmatpush1.bf16.msra.mxu0 0
  %198 = vmatprep.subr.bf16.mxu0 0
  %199 = vmatpush1.bf16.msra.mxu0 0
  %200 = vmatprep.subr.bf16.mxu0 0
  %201 = vmatpush1.bf16.msra.mxu0 0
  %202 = vmatprep.subr.bf16.mxu0 0
  %203 = vmatpush1.bf16.msra.mxu0 0
  %204 = vmatprep.subr.bf16.mxu0 0
  %205 = vmatpush1.bf16.msra.mxu0 0
  %206 = vmatprep.subr.bf16.mxu0 0
  %207 = vmatpush1.bf16.msra.mxu0 0
  %208 = vmatprep.mubr.bf16.mxu0 0
  %209 = vmatmul.mubr.bf16.gmra.mrb[0].mxu0 %v174
  %v210 = vpop.f32.mrb[0].mxu0
  %v211 = vadd.f32 %v160, %v210
  %v212 = vpop.f32.mrb[0].mxu0
  %v213 = vpop.f32.mrb[0].mxu0
  %v214 = vadd.f32 %v160, %v213
  %v215 = vpop.f32.mrb[0].mxu0
  %216 = vdwg.mxu0
  %v217 = vtanh.pop %v211
  %v218 = vtanh.pop %v214
  %vm219 = vcmask 367936
  %v220 = vsel %vm219, %v211, -inf
  %221 = vmax.xlane.f32.xlu0 %v220
  %v222 = vpop.xlane.xlu0 %221
  %v223 = vsel %vm219, %v214, -inf
  %224 = vmax.xlane.f32.xlu0 %v223
  %v225 = vpop.xlane.xlu0 %224
  %v226 = vsub.f32 %v211, %v222
  %v227 = vsub.f32 %v214, %v225
  %v228 = vmul.f32 %v226, 1.442695
  %v229 = vpow.pop %v228
  %v230 = vmul.f32 %v227, 1.442695
  %v231 = vpow.pop %v230
  %234 = vrot.lane.b32.xlu0 %v229, 88
  %v235 = vpop.permute.xlu0 %234
  %236 = vrot.lane.b32.xlu0 %v231, 88
  %v237 = vpop.permute.xlu0 %236
  %vm240 = vcmask 39936
  %v241 = vsel %vm240, %v235, 0.0
  %242 = vadd.xlane.f32.xlu0 %v241
  %v243 = vpop.xlane.xlu0 %242
  %v244 = vsel %vm240, %v237, 0.0
  %245 = vadd.xlane.f32.xlu0 %v244
  %v246 = vpop.xlane.xlu0 %245
  %v247 = vrcp.pop %v243
  %v248 = vrcp.pop %v246
  %v249 = vmul.f32 %v229, %v247
  %v250 = vmul.f32 %v231, %v248
  %v251 = vld [vmem:[%s1 + $0x3c] sm:$0x7]
  %v252 = vunpack.c.l.bf16 %v251
  %255 = vrot.lane.b32.xlu0 %v249, 88
  %v256 = vpop.permute.xlu0 %255
  %257 = vrot.lane.b32.xlu0 %v250, 88
  %v258 = vpop.permute.xlu0 %257
  %v259 = vsel %vm240, %v256, 0
  %v261 = vsel %vm240, %v258, 0
  %vm263 = vcmask 1044480
  %v265 = vsel %vm263, %v252, 0
  %267 = vmatprep.subr.mxu0 0.0
  %268 = vmatpush1.msra.mxu0 %v265
  %269 = vmatprep.subr.mxu0 0.0
  %270 = vmatpush1.msra.mxu0 0.0
  %271 = vmatprep.subr.mxu0 0.0
  %272 = vmatpush1.msra.mxu0 0.0
  %273 = vmatprep.subr.mxu0 0.0
  %274 = vmatpush1.msra.mxu0 0.0
  %275 = vmatprep.subr.mxu0 0.0
  %276 = vmatpush1.msra.mxu0 0.0
  %277 = vmatprep.subr.mxu0 0.0
  %278 = vmatpush1.msra.mxu0 0.0
  %279 = vmatprep.subr.mxu0 0.0
  %280 = vmatpush1.msra.mxu0 0.0
  %281 = vmatprep.subr.mxu0 0.0
  %282 = vmatpush1.msra.mxu0 0.0
  %283 = vmatprep.subr.mxu0 0.0
  %284 = vmatpush1.msra.mxu0 0.0
  %285 = vmatprep.subr.mxu0 0.0
  %286 = vmatpush1.msra.mxu0 0.0
  %287 = vmatprep.subr.mxu0 0.0
  %288 = vmatpush1.msra.mxu0 0.0
  %289 = vmatprep.subr.mxu0 0.0
  %290 = vmatpush1.msra.mxu0 0.0
  %291 = vmatprep.subr.mxu0 0.0
  %292 = vmatpush1.msra.mxu0 0.0
  %293 = vmatprep.subr.mxu0 0.0
  %294 = vmatpush1.msra.mxu0 0.0
  %295 = vmatprep.subr.mxu0 0.0
  %296 = vmatpush1.msra.mxu0 0.0
  %297 = vmatprep.subr.mxu0 0.0
  %298 = vmatpush1.msra.mxu0 0.0
  %299 = vmatprep.subr.mxu0 0.0
  %300 = vmatpush1.msra.mxu0 0.0
  %301 = vmatprep.subr.mxu0 0.0
  %302 = vmatpush1.msra.mxu0 0.0
  %303 = vmatprep.subr.mxu0 0.0
  %304 = vmatpush1.msra.mxu0 0.0
  %305 = vmatprep.subr.mxu0 0.0
  %306 = vmatpush1.msra.mxu0 0.0
  %307 = vmatprep.subr.mxu0 0.0
  %308 = vmatpush1.msra.mxu0 0.0
  %309 = vmatprep.subr.mxu0 0.0
  %310 = vmatpush1.msra.mxu0 0.0
  %311 = vmatprep.subr.mxu0 0.0
  %312 = vmatpush1.msra.mxu0 0.0
  %313 = vmatprep.subr.mxu0 0.0
  %314 = vmatpush1.msra.mxu0 0.0
  %315 = vmatprep.subr.mxu0 0.0
  %316 = vmatpush1.msra.mxu0 0.0
  %317 = vmatprep.subr.mxu0 0.0
  %318 = vmatpush1.msra.mxu0 0.0
  %319 = vmatprep.subr.mxu0 0.0
  %320 = vmatpush1.msra.mxu0 0.0
  %321 = vmatprep.subr.mxu0 0.0
  %322 = vmatpush1.msra.mxu0 0.0
  %323 = vmatprep.subr.mxu0 0.0
  %324 = vmatpush1.msra.mxu0 0.0
  %325 = vmatprep.subr.mxu0 0.0
  %326 = vmatpush1.msra.mxu0 0.0
  %327 = vmatprep.subr.mxu0 0.0
  %328 = vmatpush1.msra.mxu0 0.0
  %329 = vmatprep.subr.mxu0 0.0
  %330 = vmatpush1.msra.mxu0 0.0
  %331 = vmatprep.mubr.f32.mxu0 0.0
  %332 = vmatmul.mubr.f32.gmra.mrb[0].mxu0 %v259
  %v333 = vpop.f32.mrb[0].mxu0
  %v334 = vadd.f32 0.0, %v333
  %v335 = vpop.f32.mrb[0].mxu0
  %336 = vmatprep.mubr.f32.mxu0 0.0
  %337 = vmatmul.mubr.f32.gmra.mrb[0].mxu0 %v261
  %v338 = vpop.f32.mrb[0].mxu0
  %v339 = vadd.f32 0.0, %v338
  %v340 = vpop.f32.mrb[0].mxu0
  %341 = vdwg.mxu0
  %v342 = vmul.f32 %v217, %v334
  %v343 = vmul.f32 %v218, %v339
  %v344 = vld [vmem:[%s1 + $0x28] sm:$0xf]
  %v345 = vld [vmem:[%s1 + $0x2c] sm:$0xf]
  %v346 = vld [vmem:[%s1 + $0x30] sm:$0xf]
  %v347 = vld [vmem:[%s1 + $0x34] sm:$0xf]
  %v348 = vld [vmem:[%s1 + $0x38] sm:$0xf]
  %v349 = vunpack.c.l.bf16 %v344
  %v350 = vunpack.c.l.bf16 %v345
  %v351 = vunpack.c.l.bf16 %v346
  %v352 = vunpack.c.l.bf16 %v347
  %v353 = vunpack.c.l.bf16 %v348
  %vm354 = vcmask 326656
  %v356 = vsel %vm354, %v342, 0
  %v359 = vsel %vm354, %v343, 0
  %361 = vmatprep.subr.mxu0 0.0
  %362 = vmatpush1.msra.mxu0 %v349
  %363 = vmatprep.subr.mxu0 0.0
  %364 = vmatpush1.msra.mxu0 %v350
  %365 = vmatprep.subr.mxu0 0.0
  %366 = vmatpush1.msra.mxu0 %v351
  %367 = vmatprep.subr.mxu0 0.0
  %368 = vmatpush1.msra.mxu0 %v352
  %369 = vmatprep.subr.mxu0 0.0
  %370 = vmatpush1.msra.mxu0 %v353
  %371 = vmatprep.subr.mxu0 0.0
  %372 = vmatpush1.msra.mxu0 0.0
  %373 = vmatprep.subr.mxu0 0.0
  %374 = vmatpush1.msra.mxu0 0.0
  %375 = vmatprep.subr.mxu0 0.0
  %376 = vmatpush1.msra.mxu0 0.0
  %377 = vmatprep.subr.mxu0 0.0
  %378 = vmatpush1.msra.mxu0 0.0
  %379 = vmatprep.subr.mxu0 0.0
  %380 = vmatpush1.msra.mxu0 0.0
  %381 = vmatprep.subr.mxu0 0.0
  %382 = vmatpush1.msra.mxu0 0.0
  %383 = vmatprep.subr.mxu0 0.0
  %384 = vmatpush1.msra.mxu0 0.0
  %385 = vmatprep.subr.mxu0 0.0
  %386 = vmatpush1.msra.mxu0 0.0
  %387 = vmatprep.subr.mxu0 0.0
  %388 = vmatpush1.msra.mxu0 0.0
  %389 = vmatprep.subr.mxu0 0.0
  %390 = vmatpush1.msra.mxu0 0.0
  %391 = vmatprep.subr.mxu0 0.0
  %392 = vmatpush1.msra.mxu0 0.0
  %393 = vmatprep.subr.mxu0 0.0
  %394 = vmatpush1.msra.mxu0 0.0
  %395 = vmatprep.subr.mxu0 0.0
  %396 = vmatpush1.msra.mxu0 0.0
  %397 = vmatprep.subr.mxu0 0.0
  %398 = vmatpush1.msra.mxu0 0.0
  %399 = vmatprep.subr.mxu0 0.0
  %400 = vmatpush1.msra.mxu0 0.0
  %401 = vmatprep.subr.mxu0 0.0
  %402 = vmatpush1.msra.mxu0 0.0
  %403 = vmatprep.subr.mxu0 0.0
  %404 = vmatpush1.msra.mxu0 0.0
  %405 = vmatprep.subr.mxu0 0.0
  %406 = vmatpush1.msra.mxu0 0.0
  %407 = vmatprep.subr.mxu0 0.0
  %408 = vmatpush1.msra.mxu0 0.0
  %409 = vmatprep.subr.mxu0 0.0
  %410 = vmatpush1.msra.mxu0 0.0
  %411 = vmatprep.subr.mxu0 0.0
  %412 = vmatpush1.msra.mxu0 0.0
  %413 = vmatprep.subr.mxu0 0.0
  %414 = vmatpush1.msra.mxu0 0.0
  %415 = vmatprep.subr.mxu0 0.0
  %416 = vmatpush1.msra.mxu0 0.0
  %417 = vmatprep.subr.mxu0 0.0
  %418 = vmatpush1.msra.mxu0 0.0
  %419 = vmatprep.subr.mxu0 0.0
  %420 = vmatpush1.msra.mxu0 0.0
  %421 = vmatprep.subr.mxu0 0.0
  %422 = vmatpush1.msra.mxu0 0.0
  %423 = vmatprep.subr.mxu0 0.0
  %424 = vmatpush1.msra.mxu0 0.0
  %425 = vmatprep.mubr.f32.mxu0 0.0
  %426 = vmatmul.mubr.f32.gmra.mrb[0].mxu0 %v356
  %v427 = vpop.f32.mrb[0].mxu0
  %v428 = vadd.f32 0.0, %v427
  %v429 = vpop.f32.mrb[0].mxu0
  %430 = vmatprep.mubr.f32.mxu0 0.0
  %431 = vmatmul.mubr.f32.gmra.mrb[0].mxu0 %v359
  %v432 = vpop.f32.mrb[0].mxu0
  %v433 = vadd.f32 0.0, %v432
  %v434 = vpop.f32.mrb[0].mxu0
  %435 = vdwg.mxu0
  %vm436 = vcmask 64512
  %437 = vst.msk [vmem:[%s3] sm:$0xff] %vm436, %v428
  %438 = vst.msk [vmem:[%s3 + $0x8] sm:$0xff] %vm436, %v433
  // Predicated region
  $region14: #{tpu_custom_call.1} parent=0 // pred_check
    _
  $region15: #{tpu_custom_call.1} parent=0 // pred_check_branch
    %440 = sbr.rel (0) target = $region17
  $region16: #{tpu_custom_call.1} parent=0 // pred_region
    _
  $region17: #{tpu_custom_call.1} parent=0 // pred_fallthru
    _
  // Predicated region
  $region18: #{tpu_custom_call.1} parent=0 // pred_check
    _
  $region19: #{tpu_custom_call.1} parent=0 // pred_check_branch
    %442 = sbr.rel (0) target = $region21
  $region20: #{tpu_custom_call.1} parent=0 // pred_region
    _
  $region21: #{tpu_custom_call.1} parent=0 // pred_fallthru
    _

// kernel: tpu_custom_call.1
$region0: #{tpu_custom_call.1}
  #allocation0 [shape = 'u32[]', space=smem, size = 0x4, offset = 0x4, fixed_abs, tag = 'smem constant byte address 0x4 - core index']
  #allocation1 [shape = 'u32[144,128]{1,0:T(1,128)}', space=vmem, size = 0x12000, scoped, tag = 'internal scratch']
  %s0 = inlined_call_operand.vmem [shape: bf16[16,16], index: 0, kind: input, shape index: {}]
  %s1 = inlined_call_operand.vmem [shape: bf16[128,45], index: 1, kind: input, shape index: {}]
  %s2 = inlined_call_operand.vmem [shape: f32[8,45], index: 2, kind: input, shape index: {}]
  %s3 = inlined_call_operand.vmem [shape: f32[16,8], index: 3, kind: output, shape index: {}]
  %s4 = sld [smem:[#allocation0]]
  $region22: #{tpu_custom_call.1} parent=0
    _
  %s6 = ssub.s32 1, %s4
  %s7 = scalar_select 0, %s6, %s4
  // Predicated region
  $region2: #{tpu_custom_call.1} parent=0 // pred_check
    _
  $region3: #{tpu_custom_call.1} parent=0 // pred_check_branch
    %9 = sbr.rel (0) target = $region5
  $region4: #{tpu_custom_call.1} parent=0 // pred_region
    _
  $region5: #{tpu_custom_call.1} parent=0 // pred_fallthru
    _
  // Predicated region
  $region6: #{tpu_custom_call.1} parent=0 // pred_check
    _
  $region7: #{tpu_custom_call.1} parent=0 // pred_check_branch
    %11 = sbr.rel (0) target = $region9
  $region8: #{tpu_custom_call.1} parent=0 // pred_region
    _
  $region9: #{tpu_custom_call.1} parent=0 // pred_fallthru
    _
  // Predicated region
  $region10: #{tpu_custom_call.1} parent=0 // pred_check
    _
  $region11: #{tpu_custom_call.1} parent=0 // pred_check_branch
    %13 = sbr.rel (0) target = $region13
  $region12: #{tpu_custom_call.1} parent=0 // pred_region
    _
  $region13: #{tpu_custom_call.1} parent=0 // pred_fallthru
    _
  %v15 = vld [vmem:[%s0] sm:$0xf]
  %v16 = vld [vmem:[%s0 + $0x4] sm:$0xf]
  %v17 = vld [vmem:[%s1] sm:$0xf]
  %v18 = vld [vmem:[%s1 + $0x4] sm:$0xf]
  %v19 = vld [vmem:[%s2] sm:$0x1]
  %v20 = vlaneseq
  %v21 = vshrl.u32 %v20, 7
  %v22 = vsub.s32 0, %v21
  %v23 = vrot.slane %v19, %v22
  %v26 = vunpack.c.l.b16 %v15
  %v27 = vunpack.c.l.b16 %v16
  %v28 = vpack.c.b16 %v27, %v26
  %v31 = vunpack.c.l.b16 %v17
  %v32 = vunpack.c.l.b16 %v18
  %v33 = vpack.c.b16 %v32, %v31
  %vm35 = vcmask 130048
  %v37 = vsel %vm35, %v28, 0
  %39 = vmatprep.subr.bf16.mxu0 0
  %40 = vmatpush1.bf16.msra.mxu0 %v33
  %41 = vmatprep.subr.bf16.mxu0 0
  %42 = vmatpush1.bf16.msra.mxu0 0
  %43 = vmatprep.subr.bf16.mxu0 0
  %44 = vmatpush1.bf16.msra.mxu0 0
  %45 = vmatprep.subr.bf16.mxu0 0
  %46 = vmatpush1.bf16.msra.mxu0 0
  %47 = vmatprep.subr.bf16.mxu0 0
  %48 = vmatpush1.bf16.msra.mxu0 0
  %49 = vmatprep.subr.bf16.mxu0 0
  %50 = vmatpush1.bf16.msra.mxu0 0
  %51 = vmatprep.subr.bf16.mxu0 0
  %52 = vmatpush1.bf16.msra.mxu0 0
  %53 = vmatprep.subr.bf16.mxu0 0
  %54 = vmatpush1.bf16.msra.mxu0 0
  %55 = vmatprep.subr.bf16.mxu0 0
  %56 = vmatpush1.bf16.msra.mxu0 0
  %57 = vmatprep.subr.bf16.mxu0 0
  %58 = vmatpush1.bf16.msra.mxu0 0
  %59 = vmatprep.subr.bf16.mxu0 0
  %60 = vmatpush1.bf16.msra.mxu0 0
  %61 = vmatprep.subr.bf16.mxu0 0
  %62 = vmatpush1.bf16.msra.mxu0 0
  %63 = vmatprep.subr.bf16.mxu0 0
  %64 = vmatpush1.bf16.msra.mxu0 0
  %65 = vmatprep.subr.bf16.mxu0 0
  %66 = vmatpush1.bf16.msra.mxu0 0
  %67 = vmatprep.subr.bf16.mxu0 0
  %68 = vmatpush1.bf16.msra.mxu0 0
  %69 = vmatprep.subr.bf16.mxu0 0
  %70 = vmatpush1.bf16.msra.mxu0 0
  %71 = vmatprep.mubr.bf16.mxu0 0
  %72 = vmatmul.mubr.bf16.gmra.mrb[0].mxu0 %v37
  %v73 = vpop.f32.mrb[0].mxu0
  %v74 = vadd.f32 %v23, %v73
  %v75 = vpop.f32.mrb[0].mxu0
  %v76 = vpop.f32.mrb[0].mxu0
  %v77 = vadd.f32 %v23, %v76
  %v78 = vpop.f32.mrb[0].mxu0
  %79 = vdwg.mxu0
  %v80 = vmax.f32 %v74, 0.0
  %v81 = vmax.f32 %v77, 0.0
  %v82 = vpack.c.bf16 %v81, %v80
  %v83 = vld [vmem:[%s1 + $0x8] sm:$0xf]
  %v84 = vld [vmem:[%s1 + $0xc] sm:$0xf]
  %v85 = vld [vmem:[%s1 + $0x10] sm:$0xf]
  %v86 = vld [vmem:[%s1 + $0x14] sm:$0xf]
  %v87 = vld [vmem:[%s2 + $0x1] sm:$0x1]
  %v88 = vlaneseq
  %v89 = vshrl.u32 %v88, 7
  %v90 = vsub.s32 0, %v89
  %v91 = vrot.slane %v87, %v90
  %v96 = vunpack.c.l.b16 %v83
  %v97 = vunpack.c.l.b16 %v84
  %v98 = vunpack.c.l.b16 %v85
  %v99 = vunpack.c.l.b16 %v86
  %v100 = vpack.c.b16 %v97, %v96
  %v101 = vpack.c.b16 %v99, %v98
  %vm104 = vcmask 261120
  %v106 = vsel %vm104, %v82, 0
  %108 = vmatprep.subr.bf16.mxu0 0
  %109 = vmatpush1.bf16.msra.mxu0 %v100
  %110 = vmatprep.subr.bf16.mxu0 0
  %111 = vmatpush1.bf16.msra.mxu0 %v101
  %112 = vmatprep.subr.bf16.mxu0 0
  %113 = vmatpush1.bf16.msra.mxu0 0
  %114 = vmatprep.subr.bf16.mxu0 0
  %115 = vmatpush1.bf16.msra.mxu0 0
  %116 = vmatprep.subr.bf16.mxu0 0
  %117 = vmatpush1.bf16.msra.mxu0 0
  %118 = vmatprep.subr.bf16.mxu0 0
  %119 = vmatpush1.bf16.msra.mxu0 0
  %120 = vmatprep.subr.bf16.mxu0 0
  %121 = vmatpush1.bf16.msra.mxu0 0
  %122 = vmatprep.subr.bf16.mxu0 0
  %123 = vmatpush1.bf16.msra.mxu0 0
  %124 = vmatprep.subr.bf16.mxu0 0
  %125 = vmatpush1.bf16.msra.mxu0 0
  %126 = vmatprep.subr.bf16.mxu0 0
  %127 = vmatpush1.bf16.msra.mxu0 0
  %128 = vmatprep.subr.bf16.mxu0 0
  %129 = vmatpush1.bf16.msra.mxu0 0
  %130 = vmatprep.subr.bf16.mxu0 0
  %131 = vmatpush1.bf16.msra.mxu0 0
  %132 = vmatprep.subr.bf16.mxu0 0
  %133 = vmatpush1.bf16.msra.mxu0 0
  %134 = vmatprep.subr.bf16.mxu0 0
  %135 = vmatpush1.bf16.msra.mxu0 0
  %136 = vmatprep.subr.bf16.mxu0 0
  %137 = vmatpush1.bf16.msra.mxu0 0
  %138 = vmatprep.subr.bf16.mxu0 0
  %139 = vmatpush1.bf16.msra.mxu0 0
  %140 = vmatprep.mubr.bf16.mxu0 0
  %141 = vmatmul.mubr.bf16.gmra.mrb[0].mxu0 %v106
  %v142 = vpop.f32.mrb[0].mxu0
  %v143 = vadd.f32 %v91, %v142
  %v144 = vpop.f32.mrb[0].mxu0
  %v145 = vpop.f32.mrb[0].mxu0
  %v146 = vadd.f32 %v91, %v145
  %v147 = vpop.f32.mrb[0].mxu0
  %148 = vdwg.mxu0
  %v149 = vmax.f32 %v143, 0.0
  %v150 = vmax.f32 %v146, 0.0
  %v151 = vpack.c.bf16 %v150, %v149
  %v152 = vld [vmem:[%s1 + $0x18] sm:$0xf]
  %v153 = vld [vmem:[%s1 + $0x1c] sm:$0xf]
  %v154 = vld [vmem:[%s1 + $0x20] sm:$0xf]
  %v155 = vld [vmem:[%s1 + $0x24] sm:$0xf]
  %v156 = vld [vmem:[%s2 + $0x2] sm:$0x1]
  %v157 = vlaneseq
  %v158 = vshrl.u32 %v157, 7
  %v159 = vsub.s32 0, %v158
  %v160 = vrot.slane %v156, %v159
  %v165 = vunpack.c.l.b16 %v152
  %v166 = vunpack.c.l.b16 %v153
  %v167 = vunpack.c.l.b16 %v154
  %v168 = vunpack.c.l.b16 %v155
  %v169 = vpack.c.b16 %v166, %v165
  %v170 = vpack.c.b16 %v168, %v167
  %v174 = vsel %vm104, %v151, 0
  %176 = vmatprep.subr.bf16.mxu0 0
  %177 = vmatpush1.bf16.msra.mxu0 %v169
  %178 = vmatprep.subr.bf16.mxu0 0
  %179 = vmatpush1.bf16.msra.mxu0 %v170
  %180 = vmatprep.subr.bf16.mxu0 0
  %181 = vmatpush1.bf16.msra.mxu0 0
  %182 = vmatprep.subr.bf16.mxu0 0
  %183 = vmatpush1.bf16.msra.mxu0 0
  %184 = vmatprep.subr.bf16.mxu0 0
  %185 = vmatpush1.bf16.msra.mxu0 0
  %186 = vmatprep.subr.bf16.mxu0 0
  %187 = vmatpush1.bf16.msra.mxu0 0
  %188 = vmatprep.subr.bf16.mxu0 0
  %189 = vmatpush1.bf16.msra.mxu0 0
  %190 = vmatprep.subr.bf16.mxu0 0
  %191 = vmatpush1.bf16.msra.mxu0 0
  %192 = vmatprep.subr.bf16.mxu0 0
  %193 = vmatpush1.bf16.msra.mxu0 0
  %194 = vmatprep.subr.bf16.mxu0 0
  %195 = vmatpush1.bf16.msra.mxu0 0
  %196 = vmatprep.subr.bf16.mxu0 0
  %197 = vmatpush1.bf16.msra.mxu0 0
  %198 = vmatprep.subr.bf16.mxu0 0
  %199 = vmatpush1.bf16.msra.mxu0 0
  %200 = vmatprep.subr.bf16.mxu0 0
  %201 = vmatpush1.bf16.msra.mxu0 0
  %202 = vmatprep.subr.bf16.mxu0 0
  %203 = vmatpush1.bf16.msra.mxu0 0
  %204 = vmatprep.subr.bf16.mxu0 0
  %205 = vmatpush1.bf16.msra.mxu0 0
  %206 = vmatprep.subr.bf16.mxu0 0
  %207 = vmatpush1.bf16.msra.mxu0 0
  %208 = vmatprep.mubr.bf16.mxu0 0
  %209 = vmatmul.mubr.bf16.gmra.mrb[0].mxu0 %v174
  %v210 = vpop.f32.mrb[0].mxu0
  %v211 = vadd.f32 %v160, %v210
  %v212 = vpop.f32.mrb[0].mxu0
  %v213 = vpop.f32.mrb[0].mxu0
  %v214 = vadd.f32 %v160, %v213
  %v215 = vpop.f32.mrb[0].mxu0
  %216 = vdwg.mxu0
  %v217 = vtanh.pop %v211
  %v218 = vtanh.pop %v214
  %vm219 = vcmask 367936
  %v220 = vsel %vm219, %v211, -inf
  %221 = vmax.xlane.f32.xlu0 %v220
  %v222 = vpop.xlane.xlu0 %221
  %v223 = vsel %vm219, %v214, -inf
  %224 = vmax.xlane.f32.xlu0 %v223
  %v225 = vpop.xlane.xlu0 %224
  %v226 = vsub.f32 %v211, %v222
  %v227 = vsub.f32 %v214, %v225
  %v228 = vmul.f32 %v226, 1.442695
  %v229 = vpow.pop %v228
  %v230 = vmul.f32 %v227, 1.442695
  %v231 = vpow.pop %v230
  %234 = vrot.lane.b32.xlu0 %v229, 88
  %v235 = vpop.permute.xlu0 %234
  %236 = vrot.lane.b32.xlu0 %v231, 88
  %v237 = vpop.permute.xlu0 %236
  %vm240 = vcmask 39936
  %v241 = vsel %vm240, %v235, 0.0
  %242 = vadd.xlane.f32.xlu0 %v241
  %v243 = vpop.xlane.xlu0 %242
  %v244 = vsel %vm240, %v237, 0.0
  %245 = vadd.xlane.f32.xlu0 %v244
  %v246 = vpop.xlane.xlu0 %245
  %v247 = vrcp.pop %v243
  %v248 = vrcp.pop %v246
  %v249 = vmul.f32 %v229, %v247
  %v250 = vmul.f32 %v231, %v248
  %v251 = vld [vmem:[%s1 + $0x3c] sm:$0x7]
  %v252 = vunpack.c.l.bf16 %v251
  %255 = vrot.lane.b32.xlu0 %v249, 88
  %v256 = vpop.permute.xlu0 %255
  %257 = vrot.lane.b32.xlu0 %v250, 88
  %v258 = vpop.permute.xlu0 %257
  %v259 = vsel %vm240, %v256, 0
  %v261 = vsel %vm240, %v258, 0
  %vm263 = vcmask 1044480
  %v265 = vsel %vm263, %v252, 0
  %267 = vmatprep.subr.mxu0 0.0
  %268 = vmatpush1.msra.mxu0 %v265
  %269 = vmatprep.subr.mxu0 0.0
  %270 = vmatpush1.msra.mxu0 0.0
  %271 = vmatprep.subr.mxu0 0.0
  %272 = vmatpush1.msra.mxu0 0.0
  %273 = vmatprep.subr.mxu0 0.0
  %274 = vmatpush1.msra.mxu0 0.0
  %275 = vmatprep.subr.mxu0 0.0
  %276 = vmatpush1.msra.mxu0 0.0
  %277 = vmatprep.subr.mxu0 0.0
  %278 = vmatpush1.msra.mxu0 0.0
  %279 = vmatprep.subr.mxu0 0.0
  %280 = vmatpush1.msra.mxu0 0.0
  %281 = vmatprep.subr.mxu0 0.0
  %282 = vmatpush1.msra.mxu0 0.0
  %283 = vmatprep.subr.mxu0 0.0
  %284 = vmatpush1.msra.mxu0 0.0
  %285 = vmatprep.subr.mxu0 0.0
  %286 = vmatpush1.msra.mxu0 0.0
  %287 = vmatprep.subr.mxu0 0.0
  %288 = vmatpush1.msra.mxu0 0.0
  %289 = vmatprep.subr.mxu0 0.0
  %290 = vmatpush1.msra.mxu0 0.0
  %291 = vmatprep.subr.mxu0 0.0
  %292 = vmatpush1.msra.mxu0 0.0
  %293 = vmatprep.subr.mxu0 0.0
  %294 = vmatpush1.msra.mxu0 0.0
  %295 = vmatprep.subr.mxu0 0.0
  %296 = vmatpush1.msra.mxu0 0.0
  %297 = vmatprep.subr.mxu0 0.0
  %298 = vmatpush1.msra.mxu0 0.0
  %299 = vmatprep.subr.mxu0 0.0
  %300 = vmatpush1.msra.mxu0 0.0
  %301 = vmatprep.subr.mxu0 0.0
  %302 = vmatpush1.msra.mxu0 0.0
  %303 = vmatprep.subr.mxu0 0.0
  %304 = vmatpush1.msra.mxu0 0.0
  %305 = vmatprep.subr.mxu0 0.0
  %306 = vmatpush1.msra.mxu0 0.0
  %307 = vmatprep.subr.mxu0 0.0
  %308 = vmatpush1.msra.mxu0 0.0
  %309 = vmatprep.subr.mxu0 0.0
  %310 = vmatpush1.msra.mxu0 0.0
  %311 = vmatprep.subr.mxu0 0.0
  %312 = vmatpush1.msra.mxu0 0.0
  %313 = vmatprep.subr.mxu0 0.0
  %314 = vmatpush1.msra.mxu0 0.0
  %315 = vmatprep.subr.mxu0 0.0
  %316 = vmatpush1.msra.mxu0 0.0
  %317 = vmatprep.subr.mxu0 0.0
  %318 = vmatpush1.msra.mxu0 0.0
  %319 = vmatprep.subr.mxu0 0.0
  %320 = vmatpush1.msra.mxu0 0.0
  %321 = vmatprep.subr.mxu0 0.0
  %322 = vmatpush1.msra.mxu0 0.0
  %323 = vmatprep.subr.mxu0 0.0
  %324 = vmatpush1.msra.mxu0 0.0
  %325 = vmatprep.subr.mxu0 0.0
  %326 = vmatpush1.msra.mxu0 0.0
  %327 = vmatprep.subr.mxu0 0.0
  %328 = vmatpush1.msra.mxu0 0.0
  %329 = vmatprep.subr.mxu0 0.0
  %330 = vmatpush1.msra.mxu0 0.0
  %331 = vmatprep.mubr.f32.mxu0 0.0
  %332 = vmatmul.mubr.f32.gmra.mrb[0].mxu0 %v259
  %v333 = vpop.f32.mrb[0].mxu0
  %v334 = vadd.f32 0.0, %v333
  %v335 = vpop.f32.mrb[0].mxu0
  %336 = vmatprep.mubr.f32.mxu0 0.0
  %337 = vmatmul.mubr.f32.gmra.mrb[0].mxu0 %v261
  %v338 = vpop.f32.mrb[0].mxu0
  %v339 = vadd.f32 0.0, %v338
  %v340 = vpop.f32.mrb[0].mxu0
  %341 = vdwg.mxu0
  %v342 = vmul.f32 %v217, %v334
  %v343 = vmul.f32 %v218, %v339
  %v344 = vld [vmem:[%s1 + $0x28] sm:$0xf]
  %v345 = vld [vmem:[%s1 + $0x2c] sm:$0xf]
  %v346 = vld [vmem:[%s1 + $0x30] sm:$0xf]
  %v347 = vld [vmem:[%s1 + $0x34] sm:$0xf]
  %v348 = vld [vmem:[%s1 + $0x38] sm:$0xf]
  %v349 = vunpack.c.l.bf16 %v344
  %v350 = vunpack.c.l.bf16 %v345
  %v351 = vunpack.c.l.bf16 %v346
  %v352 = vunpack.c.l.bf16 %v347
  %v353 = vunpack.c.l.bf16 %v348
  %vm354 = vcmask 326656
  %v356 = vsel %vm354, %v342, 0
  %v359 = vsel %vm354, %v343, 0
  %361 = vmatprep.subr.mxu0 0.0
  %362 = vmatpush1.msra.mxu0 %v349
  %363 = vmatprep.subr.mxu0 0.0
  %364 = vmatpush1.msra.mxu0 %v350
  %365 = vmatprep.subr.mxu0 0.0
  %366 = vmatpush1.msra.mxu0 %v351
  %367 = vmatprep.subr.mxu0 0.0
  %368 = vmatpush1.msra.mxu0 %v352
  %369 = vmatprep.subr.mxu0 0.0
  %370 = vmatpush1.msra.mxu0 %v353
  %371 = vmatprep.subr.mxu0 0.0
  %372 = vmatpush1.msra.mxu0 0.0
  %373 = vmatprep.subr.mxu0 0.0
  %374 = vmatpush1.msra.mxu0 0.0
  %375 = vmatprep.subr.mxu0 0.0
  %376 = vmatpush1.msra.mxu0 0.0
  %377 = vmatprep.subr.mxu0 0.0
  %378 = vmatpush1.msra.mxu0 0.0
  %379 = vmatprep.subr.mxu0 0.0
  %380 = vmatpush1.msra.mxu0 0.0
  %381 = vmatprep.subr.mxu0 0.0
  %382 = vmatpush1.msra.mxu0 0.0
  %383 = vmatprep.subr.mxu0 0.0
  %384 = vmatpush1.msra.mxu0 0.0
  %385 = vmatprep.subr.mxu0 0.0
  %386 = vmatpush1.msra.mxu0 0.0
  %387 = vmatprep.subr.mxu0 0.0
  %388 = vmatpush1.msra.mxu0 0.0
  %389 = vmatprep.subr.mxu0 0.0
  %390 = vmatpush1.msra.mxu0 0.0
  %391 = vmatprep.subr.mxu0 0.0
  %392 = vmatpush1.msra.mxu0 0.0
  %393 = vmatprep.subr.mxu0 0.0
  %394 = vmatpush1.msra.mxu0 0.0
  %395 = vmatprep.subr.mxu0 0.0
  %396 = vmatpush1.msra.mxu0 0.0
  %397 = vmatprep.subr.mxu0 0.0
  %398 = vmatpush1.msra.mxu0 0.0
  %399 = vmatprep.subr.mxu0 0.0
  %400 = vmatpush1.msra.mxu0 0.0
  %401 = vmatprep.subr.mxu0 0.0
  %402 = vmatpush1.msra.mxu0 0.0
  %403 = vmatprep.subr.mxu0 0.0
  %404 = vmatpush1.msra.mxu0 0.0
  %405 = vmatprep.subr.mxu0 0.0
  %406 = vmatpush1.msra.mxu0 0.0
  %407 = vmatprep.subr.mxu0 0.0
  %408 = vmatpush1.msra.mxu0 0.0
  %409 = vmatprep.subr.mxu0 0.0
  %410 = vmatpush1.msra.mxu0 0.0
  %411 = vmatprep.subr.mxu0 0.0
  %412 = vmatpush1.msra.mxu0 0.0
  %413 = vmatprep.subr.mxu0 0.0
  %414 = vmatpush1.msra.mxu0 0.0
  %415 = vmatprep.subr.mxu0 0.0
  %416 = vmatpush1.msra.mxu0 0.0
  %417 = vmatprep.subr.mxu0 0.0
  %418 = vmatpush1.msra.mxu0 0.0
  %419 = vmatprep.subr.mxu0 0.0
  %420 = vmatpush1.msra.mxu0 0.0
  %421 = vmatprep.subr.mxu0 0.0
  %422 = vmatpush1.msra.mxu0 0.0
  %423 = vmatprep.subr.mxu0 0.0
  %424 = vmatpush1.msra.mxu0 0.0
  %425 = vmatprep.mubr.f32.mxu0 0.0
  %426 = vmatmul.mubr.f32.gmra.mrb[0].mxu0 %v356
  %v427 = vpop.f32.mrb[0].mxu0
  %v428 = vadd.f32 0.0, %v427
  %v429 = vpop.f32.mrb[0].mxu0
  %430 = vmatprep.mubr.f32.mxu0 0.0
  %431 = vmatmul.mubr.f32.gmra.mrb[0].mxu0 %v359
  %v432 = vpop.f32.mrb[0].mxu0
  %v433 = vadd.f32 0.0, %v432
  %v434 = vpop.f32.mrb[0].mxu0
  %435 = vdwg.mxu0
  %vm436 = vcmask 64512
  %437 = vst.msk [vmem:[%s3] sm:$0xff] %vm436, %v428
  %438 = vst.msk [vmem:[%s3 + $0x8] sm:$0xff] %vm436, %v433
  // Predicated region
  $region14: #{tpu_custom_call.1} parent=0 // pred_check
    _
  $region15: #{tpu_custom_call.1} parent=0 // pred_check_branch
    %440 = sbr.rel (0) target = $region17
  $region16: #{tpu_custom_call.1} parent=0 // pred_region
    _
  $region17: #{tpu_custom_call.1} parent=0 // pred_fallthru
    _
  // Predicated region
  $region18: #{tpu_custom_call.1} parent=0 // pred_check
    _
  $region19: #{tpu_custom_call.1} parent=0 // pred_check_branch
    %442 = sbr.rel (0) target = $region21
  $region20: #{tpu_custom_call.1} parent=0 // pred_region
    _
  $region21: #{tpu_custom_call.1} parent=0 // pred_fallthru
    _

</llo_original>
